<compile_context>
chip_gen: v7x
topology: tpu7x:2x2x1
jax: 0.10.0
libtpu: 0.0.40
codegen_flags: <defaults>
</compile_context>

<pallas_src>
import math

import jax
import jax.numpy as jnp
from jax.experimental import pallas as pl
from jax.experimental.pallas import tpu as pltpu


def _copy_kernel(x_ref, o_ref):
    # Straight tile copy (pure load/store; no compute).
    o_ref[...] = x_ref[...]


def _slab_factor(total: int):
    """Pick a lane/sublane-dense 2D factorization (rows, cols) of `total`:
    cols a multiple of 128 (prefer large), rows a multiple of 8 if possible."""
    fallback = None
    for c in (2048, 1024, 512, 256, 128):
        if total % c:
            continue
        r = total // c
        if r % 8 == 0:
            return r, c
        if fallback is None:
            fallback = (r, c)
    return fallback  # None if total is not a multiple of 128


def _pallas_copy_2d(slab: jax.Array) -> jax.Array:
    """Tiled, pipelined identity copy of a 2D slab through VMEM."""
    r, c = slab.shape
    itemsize = jnp.dtype(slab.dtype).itemsize

    # ~1 MiB row-block tiles: amortizes per-grid-step overhead while keeping
    # 2 refs x 2 pipeline buffers well under v7x's 32 MiB scoped VMEM default.
    target_bytes = 1 << 20
    tr = max(8, min(r, target_bytes // (c * itemsize)))
    tr -= tr % 8
    if tr == 0 or r % 8 != 0:
        # Block must equal the full dim when rows are not sublane-aligned.
        tr = r

    grid = (pl.cdiv(r, tr),)

    return pl.pallas_call(
        _copy_kernel,
        out_shape=jax.ShapeDtypeStruct((r, c), slab.dtype),
        grid=grid,
        in_specs=[pl.BlockSpec((tr, c), lambda i: (i, 0))],
        out_specs=pl.BlockSpec((tr, c), lambda i: (i, 0)),
        compiler_params=pltpu.CompilerParams(
            dimension_semantics=("parallel",),
        ),
        # TODO(synk): if the caller donates its input, add
        # input_output_aliases={0: 0} to drop the second HBM buffer.
    )(slab)


def pallas_reshape(x: jax.Array, shape) -> jax.Array:
    """Equivalent of torch `x.view(*shape)` (supports a single -1 dim)."""
    total = math.prod(x.shape) if x.shape else 1

    # Resolve -1 exactly like torch.Tensor.view.
    shape = tuple(int(d) for d in shape)
    if any(d == -1 for d in shape):
        known = 1
        for d in shape:
            if d != -1:
                known *= d
        shape = tuple(total // known if d == -1 else d for d in shape)
    assert math.prod(shape) == total, "view shape incompatible with input"

    # Metadata-only row-major collapse to a lane/sublane-dense slab.
    fac = _slab_factor(total)
    slab = x.reshape(fac) if fac is not None else x.reshape(1, total)

    # Data-movement hot path: tiled Pallas copy.
    out = _pallas_copy_2d(slab)

    # Free metadata-only reshape to the requested view shape.
    return out.reshape(shape)


if __name__ == "__main__":
    key = jax.random.PRNGKey(0)
    # Small NCHW input consistent with the module's forward.
    x = jax.random.normal(key, (2, 4, 16, 16), dtype=jnp.float32)

    target_shape = (2, -1)  # Reshape((2, -1)) == x.view(2, -1)
    ref = x.reshape(2, -1)

    y = pallas_reshape(x, target_shape)
    jax.block_until_ready(y)

    assert y.shape == ref.shape
    assert y.dtype == x.dtype
    assert bool(jnp.array_equal(y, ref))

    print("KERNEL_OK")
</pallas_src>

<mosaic_0001>
module attributes {stable_mosaic.version = 11 : i64} {
  func.func @_copy_kernel(%arg0: i32, %arg1: memref<8x256xf32, #tpu.memory_space<vmem>>, %arg2: memref<8x256xf32, #tpu.memory_space<vmem>>) attributes {dimension_semantics = [#tpu.dimension_semantics<parallel>], iteration_bounds = array<i64: 1>, scalar_prefetch = 0 : i64, scratch_operands = 0 : i64, tpu.core_type = #tpu.core_type<tc>, window_params = [{transform_indices = @transform_0, window_bounds = array<i64: 8, 256>}, {transform_indices = @transform_1, window_bounds = array<i64: 8, 256>}]} {
    %c0 = arith.constant 0 : index
    %c0_0 = arith.constant 0 : index
    %0 = vector.load %arg1[%c0, %c0_0] : memref<8x256xf32, #tpu.memory_space<vmem>>, vector<8x256xf32>
    %c0_1 = arith.constant 0 : index
    %c0_2 = arith.constant 0 : index
    %1 = vector.load %arg2[%c0_1, %c0_2] : memref<8x256xf32, #tpu.memory_space<vmem>>, vector<8x256xf32>
    tpu.vector_store %arg2[%c0_1, %c0_2], %0 {strides = array<i32>} : memref<8x256xf32, #tpu.memory_space<vmem>>, vector<8x256xf32>,
    return
  }
  func.func @transform_0(%arg0: i32) -> (i32, i32) {
    %c0_i32 = arith.constant 0 : i32
    %c0_i32_0 = arith.constant 0 : i32
    return %arg0, %c0_i32 : i32, i32
  }
  func.func @transform_1(%arg0: i32) -> (i32, i32) {
    %c0_i32 = arith.constant 0 : i32
    %c0_i32_0 = arith.constant 0 : i32
    return %arg0, %c0_i32 : i32, i32
  }
}

</mosaic_0001>

<llo_original>
// kernel: tpu_custom_call.1
$region0: #{tpu_custom_call.1}
  #allocation0 [shape = 'u32[]', space=smem, size = 0x4, offset = 0x4, fixed_abs, tag = 'smem constant byte address 0x4 - core index']
  #allocation1 [shape = 'u32[144,128]{1,0:T(1,128)}', space=vmem, size = 0x12000, scoped, tag = 'internal scratch']
  %s0 = inlined_call_operand.hbm [shape: f32[8,256], index: 0, kind: input, shape index: {}]
  %s1 = inlined_call_operand.hbm [shape: f32[8,256], index: 1, kind: output, shape index: {}]
  %s2 = sld [smem:[#allocation0]]
  $region18: #{tpu_custom_call.1} parent=0
    _
  %s4 = ssub.s32 1, %s2
  %s5 = scalar_select 0, %s4, %s2
  $region1: #{tpu_custom_call.1} parent=0
    #allocation2 [shape = 'u8[8192]{0}', space=vmem, size = 0x2000, scoped, tag = 'input window, operand 0, single buffered']
    #allocation3 [shape = 's32[1]{0}', space=sflag, size = 0x4, scoped, tag = 'scoped memory for tpu_custom_call.1']
    #allocation4 [shape = 's32[1]{0}', space=sflag, size = 0x4, scoped, tag = 'scoped memory for tpu_custom_call.1']
    #allocation5 [shape = 'u8[8192]{0}', space=vmem, size = 0x2000, scoped, tag = 'output window, operand 0, single buffered']
    %6 = vsyncpa [#allocation3], 0
    %7 = vsyncpa [#allocation4], 0
    // Predicated region
    $region2: #{tpu_custom_call.1} parent=1 // pred_check
      _
    $region3: #{tpu_custom_call.1} parent=1 // pred_check_branch
      %9 = sbr.rel (0) target = $region5
    $region4: #{tpu_custom_call.1} parent=1 // pred_region
      %s11 = ssub.s32 256, 256
      %12 = vsyncadd [#allocation3], %s11
      %s14 = sshll.u32 [#allocation2], 4
      %s15 = int_to_ptr.vmem [resolvable:$true] %s14
      %17 = dma.hbm_to_vmem [thread:$0]  %s0, 256, %s15, [#allocation3]
    $region5: #{tpu_custom_call.1} parent=1 // pred_fallthru
      _
    // Predicated region
    $region6: #{tpu_custom_call.1} parent=1 // pred_check
      _
    $region7: #{tpu_custom_call.1} parent=1 // pred_check_branch
      %19 = sbr.rel (0) target = $region9
    $region8: #{tpu_custom_call.1} parent=1 // pred_region
      %20 = dma.done [#allocation3], 256
    $region9: #{tpu_custom_call.1} parent=1 // pred_fallthru
      _
    %v21 = vld [vmem:[#allocation2] sm:$0xff]
    %v22 = vld [vmem:[#allocation2 + $0x8] sm:$0xff]
    %23 = vst [vmem:[#allocation5] sm:$0xff] %v21
    %24 = vst [vmem:[#allocation5 + $0x8] sm:$0xff] %v22
    // Predicated region
    $region10: #{tpu_custom_call.1} parent=1 // pred_check
      _
    $region11: #{tpu_custom_call.1} parent=1 // pred_check_branch
      %26 = sbr.rel (0) target = $region13
    $region12: #{tpu_custom_call.1} parent=1 // pred_region
      %s28 = ssub.s32 256, 256
      %29 = vsyncadd [#allocation4], %s28
      %s31 = sshll.u32 [#allocation5], 4
      %s32 = int_to_ptr.vmem [resolvable:$true] %s31
      %34 = dma.vmem_to_hbm [thread:$0]  %s32, 256, %s1, [#allocation4]
    $region13: #{tpu_custom_call.1} parent=1 // pred_fallthru
      _
    // Predicated region
    $region14: #{tpu_custom_call.1} parent=1 // pred_check
      _
    $region15: #{tpu_custom_call.1} parent=1 // pred_check_branch
      %36 = sbr.rel (0) target = $region17
    $region16: #{tpu_custom_call.1} parent=1 // pred_region
      %37 = dma.done [#allocation4], 256
    $region17: #{tpu_custom_call.1} parent=1 // pred_fallthru
      _
    %38 = vsyncpa [#allocation3], 1
    %39 = vsyncpa [#allocation4], 1

</llo_original>
